<compile_context>
chip_gen: v5e
topology: v5e:2x2
jax: 0.10.0
libtpu: 0.0.40
codegen_flags: <defaults>
</compile_context>

<pallas_src>
import jax
import jax.numpy as jnp
from jax.experimental import pallas as pl
from jax.experimental.pallas import tpu as pltpu


def _round_up(n, m):
    return ((n + m - 1) // m) * m


def _lddt_kernel(x_ref, w_ref, b_ref, out_ref):
    # x_ref:   (1, TL, F)    one (batch, L-tile) slab of the input (bf16/f32)
    # w_ref:   (NBIN, F)     full weight, resident (bf16/f32)
    # b_ref:   (NBIN, 1)     bias column (f32)
    # out_ref: (1, NBIN, TL) output block, already in final (NBIN, L) layout
    x = x_ref[0]                       # (TL, F)
    w = w_ref[...]                     # (NBIN, F)
    # Contract over F on the MXU, yielding (NBIN, TL) directly -- no transposes.
    logits = jax.lax.dot_general(
        w, x,
        dimension_numbers=(((1,), (1,)), ((), ())),
        preferred_element_type=jnp.float32,
    )                                  # (NBIN, TL) f32
    # Bias add + cast stay in f32 (v5e VPU has no bf16).
    out_ref[0] = (logits + b_ref[...]).astype(out_ref.dtype)


def lddt_network_forward(x, weight, bias, *, use_bf16=True, tile_l=None):
    """x: (B, L, n_feat); weight: (n_bin, n_feat); bias: (n_bin,).
    Returns logits permuted to (B, n_bin, L), matching LDDTNetwork.forward."""
    B, L, F = x.shape
    NBIN = weight.shape[0]
    out_dtype = x.dtype

    # Lane-dense L tile: multiple of 128, capped at 512 (keeps double-buffered
    # x/out tiles comfortably inside v7x's 64 MiB VMEM), chosen to minimize
    # padding waste for this L.
    if tile_l is None:
        candidates = (512, 384, 256, 128)
        tile_l = min(candidates, key=lambda t: (_round_up(L, t), -t))
    L_pad = _round_up(L, tile_l)
    if L_pad != L:
        # Zero-pad L; padded columns are sliced off after the call.
        x = jnp.pad(x, ((0, 0), (0, L_pad - L), (0, 0)))
    num_l_tiles = L_pad // tile_l

    in_dtype = jnp.bfloat16 if use_bf16 else x.dtype
    x_in = x.astype(in_dtype)
    w_in = weight.astype(in_dtype)
    b_col = bias.astype(jnp.float32).reshape(NBIN, 1)

    itemsize_in = jnp.dtype(in_dtype).itemsize
    itemsize_out = jnp.dtype(out_dtype).itemsize
    cost = pl.CostEstimate(
        flops=2 * B * L_pad * F * NBIN,
        transcendentals=0,
        bytes_accessed=(B * L_pad * F * itemsize_in
                        + NBIN * F * itemsize_in
                        + NBIN * 4
                        + B * NBIN * L_pad * itemsize_out),
    )

    out = pl.pallas_call(
        _lddt_kernel,
        out_shape=jax.ShapeDtypeStruct((B, NBIN, L_pad), out_dtype),
        grid_spec=pltpu.PrefetchScalarGridSpec(
            num_scalar_prefetch=0,
            grid=(B, num_l_tiles),
            in_specs=[
                pl.BlockSpec((1, tile_l, F), lambda b, l: (b, l, 0)),   # x tile
                pl.BlockSpec((NBIN, F), lambda b, l: (0, 0)),           # weight
                pl.BlockSpec((NBIN, 1), lambda b, l: (0, 0)),           # bias
            ],
            out_specs=pl.BlockSpec((1, NBIN, tile_l), lambda b, l: (b, 0, l)),
        ),
        compiler_params=pltpu.CompilerParams(
            dimension_semantics=("parallel", "parallel"),
        ),
        cost_estimate=cost,
    )(x_in, w_in, b_col)

    if L_pad != L:
        out = out[:, :, :L]
    return out


if __name__ == "__main__":
    # Small shapes consistent with the module's forward: x is (B, L, n_feat).
    B, L, N_FEAT, N_BIN = 2, 8, 32, 50

    key = jax.random.PRNGKey(0)
    kx, kw, kb = jax.random.split(key, 3)
    x = jax.random.normal(kx, (B, L, N_FEAT), dtype=jnp.float32)

    # Parameters matching LDDTNetwork.reset_parameter(): zero weight, zero bias.
    weight = jnp.zeros((N_BIN, N_FEAT), dtype=jnp.float32)
    bias = jnp.zeros((N_BIN,), dtype=jnp.float32)

    out = jax.block_until_ready(lddt_network_forward(x, weight, bias))
    ref = jnp.transpose(jnp.einsum("blf,nf->bln", x, weight) + bias, (0, 2, 1))
    assert out.shape == (B, N_BIN, L), out.shape
    assert jnp.allclose(out, ref, atol=1e-6), "mismatch vs reference (zero params)"

    # Extra correctness check with non-zero parameters (bf16 inputs ->
    # loose tolerance against the f32 reference).
    w2 = 0.1 * jax.random.normal(kw, (N_BIN, N_FEAT), dtype=jnp.float32)
    b2 = 0.1 * jax.random.normal(kb, (N_BIN,), dtype=jnp.float32)
    out2 = jax.block_until_ready(lddt_network_forward(x, w2, b2))
    ref2 = jnp.transpose(jnp.einsum("blf,nf->bln", x, w2) + b2, (0, 2, 1))
    assert out2.shape == (B, N_BIN, L), out2.shape
    assert jnp.allclose(out2, ref2, atol=5e-2, rtol=5e-2), \
        "mismatch vs reference (random params)"

    print("KERNEL_OK")
</pallas_src>

<mosaic_0001>
module attributes {stable_mosaic.version = 11 : i64} {
  func.func @_lddt_kernel(%arg0: i32, %arg1: i32, %arg2: memref<1x128x32xbf16, #tpu.memory_space<vmem>>, %arg3: memref<50x32xbf16, #tpu.memory_space<vmem>>, %arg4: memref<50x1xf32, #tpu.memory_space<vmem>>, %arg5: memref<1x50x128xf32, #tpu.memory_space<vmem>>) attributes {dimension_semantics = [#tpu.dimension_semantics<parallel>, #tpu.dimension_semantics<parallel>], iteration_bounds = array<i64: 2, 1>, scalar_prefetch = 0 : i64, scratch_operands = 0 : i64, tpu.core_type = #tpu.core_type<tc>, window_params = [{transform_indices = @transform_0, window_bounds = array<i64: 1, 128, 32>}, {pipeline_mode = #tpu.pipeline_mode<synchronous>, transform_indices = @transform_1, window_bounds = array<i64: 50, 32>}, {pipeline_mode = #tpu.pipeline_mode<synchronous>, transform_indices = @transform_2, window_bounds = array<i64: 50, 1>}, {transform_indices = @transform_3, window_bounds = array<i64: 1, 50, 128>}]} {
    %c0 = arith.constant 0 : index
    %c0_0 = arith.constant 0 : index
    %c0_1 = arith.constant 0 : index
    %0 = vector.load %arg2[%c0, %c0_0, %c0_1] : memref<1x128x32xbf16, #tpu.memory_space<vmem>>, vector<1x128x32xbf16>
    %1 = vector.shape_cast %0 : vector<1x128x32xbf16> to vector<128x32xbf16>
    %c0_2 = arith.constant 0 : index
    %c0_3 = arith.constant 0 : index
    %2 = vector.load %arg3[%c0_2, %c0_3] : memref<50x32xbf16, #tpu.memory_space<vmem>>, vector<50x32xbf16>
    %cst = arith.constant dense<0.000000e+00> : vector<50x128xf32>
    %3 = tpu.matmul %2, %1, %cst {dimension_numbers = #tpu.dot_dimension_numbers<[1], [1], [0], [0], [0, 0, 1, 0], [], []>} : vector<50x32xbf16>, vector<128x32xbf16>, vector<50x128xf32> -> vector<50x128xf32>
    %c0_4 = arith.constant 0 : index
    %c0_5 = arith.constant 0 : index
    %4 = vector.load %arg4[%c0_4, %c0_5] : memref<50x1xf32, #tpu.memory_space<vmem>>, vector<50x1xf32>
    %5 = vector.broadcast %4 : vector<50x1xf32> to vector<50x128xf32>
    %6 = arith.addf %3, %5 : vector<50x128xf32>
    %c0_6 = arith.constant 0 : index
    %c0_7 = arith.constant 0 : index
    %c0_8 = arith.constant 0 : index
    %7 = vector.load %arg5[%c0_6, %c0_7, %c0_8] : memref<1x50x128xf32, #tpu.memory_space<vmem>>, vector<1x50x128xf32>
    %8 = vector.shape_cast %7 : vector<1x50x128xf32> to vector<50x128xf32>
    %9 = vector.shape_cast %6 : vector<50x128xf32> to vector<1x50x128xf32>
    tpu.vector_store %arg5[%c0_6, %c0_7, %c0_8], %9 {strides = array<i32>} : memref<1x50x128xf32, #tpu.memory_space<vmem>>, vector<1x50x128xf32>,
    return
  }
  func.func @transform_0(%arg0: i32, %arg1: i32) -> (i32, i32, i32) {
    %c0_i32 = arith.constant 0 : i32
    %c0_i32_0 = arith.constant 0 : i32
    return %arg0, %arg1, %c0_i32 : i32, i32, i32
  }
  func.func @transform_1(%arg0: i32, %arg1: i32) -> (i32, i32) {
    %c0_i32 = arith.constant 0 : i32
    %c0_i32_0 = arith.constant 0 : i32
    %c0_i32_1 = arith.constant 0 : i32
    return %c0_i32, %c0_i32_0 : i32, i32
  }
  func.func @transform_2(%arg0: i32, %arg1: i32) -> (i32, i32) {
    %c0_i32 = arith.constant 0 : i32
    %c0_i32_0 = arith.constant 0 : i32
    %c0_i32_1 = arith.constant 0 : i32
    return %c0_i32, %c0_i32_0 : i32, i32
  }
  func.func @transform_3(%arg0: i32, %arg1: i32) -> (i32, i32, i32) {
    %c0_i32 = arith.constant 0 : i32
    %c0_i32_0 = arith.constant 0 : i32
    return %arg0, %c0_i32, %arg1 : i32, i32, i32
  }
}

</mosaic_0001>

<llo_original>
// kernel: tpu_custom_call.1
$region0: #{tpu_custom_call.1}
  #allocation0 [shape = 'u32[]', space=smem, size = 0x4, offset = 0x4, fixed_abs, tag = 'smem constant byte address 0x4 - core index']
  #allocation1 [shape = 'u32[72,128]{1,0:T(1,128)}', space=vmem, size = 0x9000, scoped, tag = 'internal scratch']
  %s0 = inlined_call_operand.vmem [shape: bf16[2,128,32], index: 0, kind: input, shape index: {}]
  %s1 = inlined_call_operand.vmem [shape: bf16[50,32], index: 1, kind: input, shape index: {}]
  %s2 = inlined_call_operand.vmem [shape: f32[50,1], index: 2, kind: input, shape index: {}]
  %s3 = inlined_call_operand.vmem [shape: f32[2,50,128], index: 3, kind: output, shape index: {}]
  %s4 = sld [smem:[#allocation0]]
  $region45: #{tpu_custom_call.1} parent=0
    _
  %s6 = ssub.s32 1, %s4
  %s7 = scalar_select 0, %s6, %s4
  loop: start=0, step=1, limit=4
  $region2: #{tpu_custom_call.1} parent=0 // loop_pre_header
    _
  $region3: #{tpu_custom_call.1} parent=0 // loop_header
    %s9 = sphi 0, %s13
    %p10 = scmp.ge.s32.totalorder %s9, 4
    %s16 = sphi 0, %s28
    %s17 = sphi 0, %s24
    %s18 = sphi 0, %s16
    %s19 = sphi 0, %s17
    %s20 = sphi 0, %s18
    %s21 = sphi 0, %s19
    %s33 = sphi 0, %s35
    %s36 = sphi 0, %s33
    %s37 = sphi 0, %s36
    %s53 = sphi 0, %s37
    %s57 = sphi 0, %s57
    %s59 = sphi 0, %s57
    %s60 = sphi 0, %s59
    %s74 = sphi 0, %s60
    %s78 = sphi 0, %s78
    %s80 = sphi 0, %s78
    %s81 = sphi 0, %s80
    %s95 = sphi 0, %s81
    %s103 = sphi 0, %s105
    %s106 = sphi 0, %s103
    %s107 = sphi 0, %s106
    %s123 = sphi 0, %s107
  $region4: #{tpu_custom_call.1} parent=0 // loop_header_branch
    %12 = sbr.rel (%p10) target = $region8
  $region5: #{tpu_custom_call.1} parent=0 // loop_body
    %s14 = ssub.s32 %s9, 1
    %s15 = ssub.s32 %s9, 2
    %s22 = sadd.s32 1, %s17
    %p23 = scmp.ge.s32.totalorder %s22, 1
    %s24 = scalar_select %p23, 0, %s22
    %s25 = sadd.s32 1, %s16
    %s26 = scalar_select %p23, %s25, %s16
    %p27 = scmp.ge.s32.totalorder %s26, 2
    %s28 = scalar_select %p27, 0, %s26
    %s29 = ssub.s32 %s16, %s28
    %s30 = ssub.s32 %s17, %s24
    %s31 = sor.u32 %s29, %s30
    %p32 = scmp.eq.s32.totalorder %s31, 0
    %s34 = sadd.s32 %s33, 1
    %s35 = scalar_select %p32, %s33, %s34
    %p38 = pneg %p32
    %p39 = scmp.eq.s32.totalorder %s9, 1
    %p40 = por %p38, %p39
    %p41 = scmp.ne.s32.totalorder %s33, %s36
    %p42 = scmp.eq.s32.totalorder %s9, 0
    %p43 = por %p41, %p42
    %p44 = scmp.ne.s32.totalorder %s33, %s36
    %p45 = scmp.eq.s32.totalorder %s14, 1
    %p46 = por %p44, %p45
    %p47 = scmp.ne.s32.totalorder %s36, %s37
    %p48 = scmp.eq.s32.totalorder %s14, 0
    %p49 = por %p47, %p48
    %p50 = scmp.ne.s32.totalorder %s36, %s37
    %p51 = scmp.eq.s32.totalorder %s15, 1
    %p52 = por %p50, %p51
    %p54 = scmp.ne.s32.totalorder %s37, %s53
    %p55 = scmp.eq.s32.totalorder %s15, 0
    %p56 = por %p54, %p55
    %s58 = sadd.s32 %s57, 1
    %p61 = scmp.eq.s32.totalorder %s9, 1
    %p62 = scmp.ne.s32.totalorder %s57, %s59
    %p63 = scmp.eq.s32.totalorder %s9, 0
    %p64 = por %p62, %p63
    %p65 = scmp.ne.s32.totalorder %s57, %s59
    %p66 = scmp.eq.s32.totalorder %s14, 1
    %p67 = por %p65, %p66
    %p68 = scmp.ne.s32.totalorder %s59, %s60
    %p69 = scmp.eq.s32.totalorder %s14, 0
    %p70 = por %p68, %p69
    %p71 = scmp.ne.s32.totalorder %s59, %s60
    %p72 = scmp.eq.s32.totalorder %s15, 1
    %p73 = por %p71, %p72
    %p75 = scmp.ne.s32.totalorder %s60, %s74
    %p76 = scmp.eq.s32.totalorder %s15, 0
    %p77 = por %p75, %p76
    %s79 = sadd.s32 %s78, 1
    %p82 = scmp.eq.s32.totalorder %s9, 1
    %p83 = scmp.ne.s32.totalorder %s78, %s80
    %p84 = scmp.eq.s32.totalorder %s9, 0
    %p85 = por %p83, %p84
    %p86 = scmp.ne.s32.totalorder %s78, %s80
    %p87 = scmp.eq.s32.totalorder %s14, 1
    %p88 = por %p86, %p87
    %p89 = scmp.ne.s32.totalorder %s80, %s81
    %p90 = scmp.eq.s32.totalorder %s14, 0
    %p91 = por %p89, %p90
    %p92 = scmp.ne.s32.totalorder %s80, %s81
    %p93 = scmp.eq.s32.totalorder %s15, 1
    %p94 = por %p92, %p93
    %p96 = scmp.ne.s32.totalorder %s81, %s95
    %p97 = scmp.eq.s32.totalorder %s15, 0
    %p98 = por %p96, %p97
    %s99 = ssub.s32 %s16, %s28
    %s100 = ssub.s32 %s17, %s24
    %s101 = sor.u32 %s99, %s100
    %p102 = scmp.eq.s32.totalorder %s101, 0
    %s104 = sadd.s32 %s103, 1
    %s105 = scalar_select %p102, %s103, %s104
    %p108 = pneg %p102
    %p109 = scmp.eq.s32.totalorder %s9, 1
    %p110 = por %p108, %p109
    %p111 = scmp.ne.s32.totalorder %s103, %s106
    %p112 = scmp.eq.s32.totalorder %s9, 0
    %p113 = por %p111, %p112
    %p114 = scmp.ne.s32.totalorder %s103, %s106
    %p115 = scmp.eq.s32.totalorder %s14, 1
    %p116 = por %p114, %p115
    %p117 = scmp.ne.s32.totalorder %s106, %s107
    %p118 = scmp.eq.s32.totalorder %s14, 0
    %p119 = por %p117, %p118
    %p120 = scmp.ne.s32.totalorder %s106, %s107
    %p121 = scmp.eq.s32.totalorder %s15, 1
    %p122 = por %p120, %p121
    %p124 = scmp.ne.s32.totalorder %s107, %s123
    %p125 = scmp.eq.s32.totalorder %s15, 0
    %p126 = por %p124, %p125
    %p127 = scmp.le.s32.totalorder 1, %s9
    %p128 = scmp.lt.s32.totalorder %s9, 3
    %p129 = pnand %p127, %p128
    %p130 = pneg %p129
    // Predicated region
    $region9: #{tpu_custom_call.1} parent=5 // pred_check
      _
    $region10: #{tpu_custom_call.1} parent=5 // pred_check_branch
      %132 = sbr.rel (%p129) target = $region12
    $region11: #{tpu_custom_call.1} parent=5 // pred_region
      %s133 = ssub.s32 %s9, 1
      // Predicated region
      $region13: #{tpu_custom_call.1} parent=11 // pred_check
        %p134 = pneg %p70
      $region14: #{tpu_custom_call.1} parent=11 // pred_check_branch
        %136 = sbr.rel (%p134) target = $region16
      $region15: #{tpu_custom_call.1} parent=11 // pred_region
        _
      $region16: #{tpu_custom_call.1} parent=11 // pred_fallthru
        _
      // Predicated region
      $region17: #{tpu_custom_call.1} parent=11 // pred_check
        %p137 = pneg %p91
      $region18: #{tpu_custom_call.1} parent=11 // pred_check_branch
        %139 = sbr.rel (%p137) target = $region20
      $region19: #{tpu_custom_call.1} parent=11 // pred_region
        _
      $region20: #{tpu_custom_call.1} parent=11 // pred_fallthru
        _
    $region12: #{tpu_custom_call.1} parent=5 // pred_fallthru
      _
    %p140 = scmp.lt.s32.totalorder %s9, 2
    // Predicated region
    $region21: #{tpu_custom_call.1} parent=5 // pred_check
      %p141 = pneg %p140
    $region22: #{tpu_custom_call.1} parent=5 // pred_check_branch
      %143 = sbr.rel (%p141) target = $region24
    $region23: #{tpu_custom_call.1} parent=5 // pred_region
      // Predicated region
      $region25: #{tpu_custom_call.1} parent=23 // pred_check
        %p144 = pneg %p43
      $region26: #{tpu_custom_call.1} parent=23 // pred_check_branch
        %146 = sbr.rel (%p144) target = $region28
      $region27: #{tpu_custom_call.1} parent=23 // pred_region
        %s147 = smul.u32 16, %s17
        %p148 = scmp.lt.s32.totalorder %s16, 1
        %s149 = scalar_select %p148, %s16, 1
        %p150 = scmp.lt.s32.totalorder %s147, 15
        %s151 = scalar_select %p150, %s147, 15
        %s152 = smul.addr %s149, 16
        %s153 = sadd.s32 %s151, %s152
        %s154 = smul.addr %s153, 4
        %s155 = scalar_lea.vmem %s0, %s154
        %s156 = smul.u32 16, %s17
      $region28: #{tpu_custom_call.1} parent=23 // pred_fallthru
        _
    $region24: #{tpu_custom_call.1} parent=5 // pred_fallthru
      _
    %p157 = scmp.le.s32.totalorder 1, %s9
    %p158 = scmp.lt.s32.totalorder %s9, 3
    %p159 = pnand %p157, %p158
    %p160 = pneg %p159
    // Predicated region
    $region29: #{tpu_custom_call.1} parent=5 // pred_check
      _
    $region30: #{tpu_custom_call.1} parent=5 // pred_check_branch
      %162 = sbr.rel (%p159) target = $region32
    $region31: #{tpu_custom_call.1} parent=5 // pred_region
      %s163 = ssub.s32 %s9, 1
      %s164 = smul.u32 16, %s19
      %p165 = scmp.lt.s32.totalorder %s18, 1
      %s166 = scalar_select %p165, %s18, 1
      %p167 = scmp.lt.s32.totalorder %s164, 15
      %s168 = scalar_select %p167, %s164, 15
      %s169 = smul.addr %s166, 16
      %s170 = sadd.s32 %s168, %s169
      %s171 = smul.addr %s170, 4
      %s172 = scalar_lea.vmem %s0, %s171
      %p173 = pneg %p49
      %p174 = pneg %p46
      %p175 = pneg %p70
      %p176 = pneg %p67
      %p177 = pneg %p91
      %p178 = pneg %p88
      %p179 = pneg %p119
      %p180 = pneg %p116
      %p181 = scmp.lt.s32.totalorder %s18, 1
      %s182 = scalar_select %p181, %s18, 1
      %p183 = scmp.lt.s32.totalorder %s19, 0
      %s184 = scalar_select %p183, %s19, 0
      %s185 = smul.addr %s182, 7
      %s186 = sadd.s32 %s184, %s185
      %s187 = smul.addr %s186, 8
      %s188 = scalar_lea.vmem %s3, %s187
      %s189 = smul.u32 16, %s19
      %p190 = scmp.lt.s32.totalorder %s18, 1
      %s191 = scalar_select %p190, %s18, 1
      %p192 = scmp.lt.s32.totalorder %s189, 15
      %s193 = scalar_select %p192, %s189, 15
      %s194 = smul.addr %s191, 16
      %s195 = sadd.s32 %s193, %s194
      %s196 = smul.addr %s195, 4
      %s197 = scalar_lea.vmem %s0, %s196
      %s198 = smul.u32 16, %s19
      %p199 = scmp.lt.s32.totalorder %s18, 1
      %s200 = scalar_select %p199, %s18, 1
      %p201 = scmp.lt.s32.totalorder %s19, 0
      %s202 = scalar_select %p201, %s19, 0
      %s203 = smul.addr %s200, 7
      %s204 = sadd.s32 %s202, %s203
      %s205 = smul.addr %s204, 8
      %s206 = scalar_lea.vmem %s3, %s205
      %v207 = vld [vmem:[%s197] sm:$0xf]
      %v208 = vld [vmem:[%s197 + $0x4] sm:$0xf]
      %v209 = vld [vmem:[%s197 + $0x8] sm:$0xf]
      %v210 = vld [vmem:[%s197 + $0xc] sm:$0xf]
      %v211 = vld [vmem:[%s197 + $0x10] sm:$0xf]
      %v212 = vld [vmem:[%s197 + $0x14] sm:$0xf]
      %v213 = vld [vmem:[%s197 + $0x18] sm:$0xf]
      %v214 = vld [vmem:[%s197 + $0x1c] sm:$0xf]
      %v215 = vld [vmem:[%s197 + $0x20] sm:$0xf]
      %v216 = vld [vmem:[%s197 + $0x24] sm:$0xf]
      %v217 = vld [vmem:[%s197 + $0x28] sm:$0xf]
      %v218 = vld [vmem:[%s197 + $0x2c] sm:$0xf]
      %v219 = vld [vmem:[%s197 + $0x30] sm:$0xf]
      %v220 = vld [vmem:[%s197 + $0x34] sm:$0xf]
      %v221 = vld [vmem:[%s197 + $0x38] sm:$0xf]
      %v222 = vld [vmem:[%s197 + $0x3c] sm:$0xf]
      %v223 = vld [vmem:[%s1] sm:$0xf]
      %v224 = vld [vmem:[%s1 + $0x4] sm:$0xf]
      %v225 = vld [vmem:[%s1 + $0x8] sm:$0xf]
      %v226 = vld [vmem:[%s1 + $0xc] sm:$0xf]
      %v227 = vld [vmem:[%s1 + $0x10] sm:$0xf]
      %v228 = vld [vmem:[%s1 + $0x14] sm:$0xf]
      %v229 = vld [vmem:[%s1 + $0x18] sm:$0x1]
      %v230 = vld [vmem:[%s2] sm:$0xff]
      %v231 = vld [vmem:[%s2 + $0x8] sm:$0xff]
      %v232 = vld [vmem:[%s2 + $0x10] sm:$0xff]
      %v233 = vld [vmem:[%s2 + $0x18] sm:$0xff]
      %v234 = vld [vmem:[%s2 + $0x20] sm:$0xff]
      %v235 = vld [vmem:[%s2 + $0x28] sm:$0xff]
      %v236 = vld [vmem:[%s2 + $0x30] sm:$0x3]
      %238 = vset.pattern.permute.xlu0 0
      %239 = vperm.xlu0 %238, %v230
      %v240 = vpop.permute.xlu0 %239
      %243 = vset.pattern.permute.xlu0 0
      %244 = vperm.xlu0 %243, %v231
      %v245 = vpop.permute.xlu0 %244
      %248 = vset.pattern.permute.xlu0 0
      %249 = vperm.xlu0 %248, %v232
      %v250 = vpop.permute.xlu0 %249
      %253 = vset.pattern.permute.xlu0 0
      %254 = vperm.xlu0 %253, %v233
      %v255 = vpop.permute.xlu0 %254
      %258 = vset.pattern.permute.xlu0 0
      %259 = vperm.xlu0 %258, %v234
      %v260 = vpop.permute.xlu0 %259
      %263 = vset.pattern.permute.xlu0 0
      %264 = vperm.xlu0 %263, %v235
      %v265 = vpop.permute.xlu0 %264
      %268 = vset.pattern.permute.xlu0 0
      %269 = vperm.xlu0 %268, %v236
      %v270 = vpop.permute.xlu0 %269
      %v279 = vunpack.c.l.b16 %v223
      %v280 = vunpack.c.l.b16 %v224
      %v281 = vunpack.c.l.b16 %v225
      %v282 = vunpack.c.l.b16 %v226
      %v283 = vunpack.c.l.b16 %v227
      %v284 = vunpack.c.l.b16 %v228
      %v285 = vunpack.c.l.b16 %v229
      %v286 = vpack.c.b16 %v280, %v279
      %v287 = vpack.c.b16 %v282, %v281
      %v288 = vpack.c.b16 %v284, %v283
      %v289 = vpack.c.b16 %v285, %v285
      %v306 = vunpack.c.l.b16 %v207
      %v307 = vunpack.c.l.b16 %v208
      %v308 = vunpack.c.l.b16 %v209
      %v309 = vunpack.c.l.b16 %v210
      %v310 = vunpack.c.l.b16 %v211
      %v311 = vunpack.c.l.b16 %v212
      %v312 = vunpack.c.l.b16 %v213
      %v313 = vunpack.c.l.b16 %v214
      %v314 = vunpack.c.l.b16 %v215
      %v315 = vunpack.c.l.b16 %v216
      %v316 = vunpack.c.l.b16 %v217
      %v317 = vunpack.c.l.b16 %v218
      %v318 = vunpack.c.l.b16 %v219
      %v319 = vunpack.c.l.b16 %v220
      %v320 = vunpack.c.l.b16 %v221
      %v321 = vunpack.c.l.b16 %v222
      %v322 = vpack.c.b16 %v307, %v306
      %v323 = vpack.c.b16 %v309, %v308
      %v324 = vpack.c.b16 %v311, %v310
      %v325 = vpack.c.b16 %v313, %v312
      %v326 = vpack.c.b16 %v315, %v314
      %v327 = vpack.c.b16 %v317, %v316
      %v328 = vpack.c.b16 %v319, %v318
      %v329 = vpack.c.b16 %v321, %v320
      %vm330 = vcmask 261120
      %v332 = vsel %vm330, %v286, 0
      %v335 = vsel %vm330, %v287, 0
      %v338 = vsel %vm330, %v288, 0
      %v341 = vsel %vm330, %v289, 0
      %v344 = vsel %vm330, %v322, 0
      %v347 = vsel %vm330, %v323, 0
      %v350 = vsel %vm330, %v324, 0
      %v353 = vsel %vm330, %v325, 0
      %v356 = vsel %vm330, %v326, 0
      %v359 = vsel %vm330, %v327, 0
      %v362 = vsel %vm330, %v328, 0
      %v365 = vsel %vm330, %v329, 0
      %367 = vmatpush.bf16.xpose.msra.mxu0 %v365
      %368 = vmatpush.bf16.xpose.msra.mxu0 %v362
      %369 = vmatpush.bf16.xpose.msra.mxu0 %v359
      %370 = vmatpush.bf16.xpose.msra.mxu0 %v356
      %371 = vmatpush.bf16.xpose.msra.mxu0 %v353
      %372 = vmatpush.bf16.xpose.msra.mxu0 %v350
      %373 = vmatpush.bf16.xpose.msra.mxu0 %v347
      %374 = vmatpush.bf16.xpose.msra.mxu0 %v344
      %375 = vmatmul.bf16.gmra.mxu0 %v332
      %v376 = vpop.f32.mrf.mxu0
      %v377 = vadd.f32 %v240, %v376
      %v378 = vpop.f32.mrf.mxu0
      %v379 = vadd.f32 %v245, %v378
      %380 = vmatmul.bf16.gmra.mxu0 %v335
      %v381 = vpop.f32.mrf.mxu0
      %v382 = vadd.f32 %v250, %v381
      %v383 = vpop.f32.mrf.mxu0
      %v384 = vadd.f32 %v255, %v383
      %385 = vmatmul.bf16.gmra.mxu0 %v338
      %v386 = vpop.f32.mrf.mxu0
      %v387 = vadd.f32 %v260, %v386
      %v388 = vpop.f32.mrf.mxu0
      %v389 = vadd.f32 %v265, %v388
      %390 = vmatmul.bf16.gmra.mxu0 %v341
      %v391 = vpop.f32.mrf.mxu0
      %v392 = vadd.f32 %v270, %v391
      %v393 = vpop.f32.mrf.mxu0
      %394 = vdwg.mxu0
      %395 = vst [vmem:[%s206] sm:$0xff] %v377
      %396 = vst [vmem:[%s206 + $0x8] sm:$0xff] %v379
      %397 = vst [vmem:[%s206 + $0x10] sm:$0xff] %v382
      %398 = vst [vmem:[%s206 + $0x18] sm:$0xff] %v384
      %399 = vst [vmem:[%s206 + $0x20] sm:$0xff] %v387
      %400 = vst [vmem:[%s206 + $0x28] sm:$0xff] %v389
      %401 = vst [vmem:[%s206 + $0x30] sm:$0x3] %v392
      %p402 = scmp.lt.s32.totalorder %s18, 1
      %s403 = scalar_select %p402, %s18, 1
      %p404 = scmp.lt.s32.totalorder %s19, 0
      %s405 = scalar_select %p404, %s19, 0
      %s406 = smul.addr %s403, 7
      %s407 = sadd.s32 %s405, %s406
      %s408 = smul.addr %s407, 8
      %s409 = scalar_lea.vmem %s3, %s408
      // Predicated region
      $region33: #{tpu_custom_call.1} parent=31 // pred_check
        %p410 = pneg %p116
      $region34: #{tpu_custom_call.1} parent=31 // pred_check_branch
        %412 = sbr.rel (%p410) target = $region36
      $region35: #{tpu_custom_call.1} parent=31 // pred_region
        _
      $region36: #{tpu_custom_call.1} parent=31 // pred_fallthru
        _
    $region32: #{tpu_custom_call.1} parent=5 // pred_fallthru
      _
    %p413 = scmp.le.s32.totalorder 2, %s9
    // Predicated region
    $region37: #{tpu_custom_call.1} parent=5 // pred_check
      %p414 = pneg %p413
    $region38: #{tpu_custom_call.1} parent=5 // pred_check_branch
      %416 = sbr.rel (%p414) target = $region40
    $region39: #{tpu_custom_call.1} parent=5 // pred_region
      %s417 = ssub.s32 %s9, 2
      // Predicated region
      $region41: #{tpu_custom_call.1} parent=39 // pred_check
        %p418 = pneg %p122
      $region42: #{tpu_custom_call.1} parent=39 // pred_check_branch
        %420 = sbr.rel (%p418) target = $region44
      $region43: #{tpu_custom_call.1} parent=39 // pred_region
        %p421 = scmp.lt.s32.totalorder %s20, 1
        %s422 = scalar_select %p421, %s20, 1
        %p423 = scmp.lt.s32.totalorder %s21, 0
        %s424 = scalar_select %p423, %s21, 0
        %s425 = smul.addr %s422, 7
        %s426 = sadd.s32 %s424, %s425
        %s427 = smul.addr %s426, 8
        %s428 = scalar_lea.vmem %s3, %s427
      $region44: #{tpu_custom_call.1} parent=39 // pred_fallthru
        _
    $region40: #{tpu_custom_call.1} parent=5 // pred_fallthru
      _
  $region6: #{tpu_custom_call.1} parent=0 // loop_footer
    %s13 = sadd.s32 1, %s9
  $region7: #{tpu_custom_call.1} parent=0 // loop_footer_branch
    %8 = sbr.rel target = $region3
  $region8: #{tpu_custom_call.1} parent=0 // loop_exit
    _

</llo_original>
